<compile_context>
chip_gen: v6e
topology: v6e:2x2x1
jax: 0.10.0
libtpu: 0.0.40
codegen_flags: <defaults>
</compile_context>

<pallas_src>
import math
from functools import partial

import jax
import jax.numpy as jnp
from jax.experimental import pallas as pl
from jax.experimental.pallas import tpu as pltpu


def _smooth_kernel(x_ref, o_ref, *, H, W, ks, channels, tap, alpha):
    # x_ref: VMEM (1, 1, HW)            one flattened input frame
    # o_ref: VMEM (1, channels, 1, HW)  all output channels of that frame
    p = ks // 2
    HW = H * W
    x = x_ref[0].astype(jnp.float32)                      # (1, HW), f32 accumulate

    # Vertical box sum: acc[i, j] = sum_{d=-p..p} x[i+d, j], zeros outside.
    # A row shift of d is a lane shift of d*W on the flattened axis; the
    # zero-fill of the shifted-out tail IS the zero padding (no mask needed).
    acc = x
    for d in range(1, p + 1):
        s = d * W
        z = jnp.zeros((1, s), jnp.float32)
        acc = acc + jnp.concatenate([x[:, s:], z], axis=1)        # x[i+d, j]
        acc = acc + jnp.concatenate([z, x[:, :HW - s]], axis=1)   # x[i-d, j]

    # Horizontal box sum on acc: out[i, j] = sum_{d=-p..p} acc[i, j+d], zeros
    # outside.  A column shift of d is a lane shift of d; taps that would cross
    # a row boundary are masked off via an iota-derived column index.
    col = jax.lax.broadcasted_iota(jnp.int32, (1, HW), 1) % W      # hoisted
    out = acc
    for d in range(1, p + 1):
        z = jnp.zeros((1, d), jnp.float32)
        right = jnp.concatenate([acc[:, d:], z], axis=1)          # acc[i, j+d]
        out = out + jnp.where(col < (W - d), right, 0.0)
        left = jnp.concatenate([z, acc[:, :HW - d]], axis=1)      # acc[i, j-d]
        out = out + jnp.where(col >= d, left, 0.0)

    out = out * tap            # single constant filter tap, hoisted multiply
    if alpha != 1:
        # Same caveat as torch: non-integer alpha on negative conv outputs -> NaN.
        out = out ** alpha

    out = out.astype(o_ref.dtype)
    for c in range(channels):  # identical channels: one compute, C plane writes
        o_ref[0, c] = out


def gaussian_smoothing(x, channels: int = 1, kernel_size: int = 3, alpha=1):
    """Pallas equivalent of GaussianSmoothing.forward for NCHW input (1 in-channel)."""
    N, cin, H, W = x.shape
    if cin != 1:
        raise ValueError("F.conv2d(weight=(C,1,ks,ks), groups=1) implies 1 input channel")
    if kernel_size % 2 != 1:
        raise ValueError("only odd kernel_size matches the PyTorch output shape")
    p = kernel_size // 2
    HW = H * W

    # Degenerate 'Gaussian': every tap equals exp(-(ks//2)^2) / (2*pi).
    tap = math.exp(-float(p * p)) / (2.0 * math.pi)

    # Free reshape (merges trailing dims only) -> lane-dense spatial axis.
    x_flat = x.reshape(N, 1, HW)

    kernel = partial(_smooth_kernel, H=H, W=W, ks=kernel_size,
                     channels=channels, tap=tap, alpha=alpha)

    itemsize = x.dtype.itemsize
    alpha_is_int = float(alpha) == int(alpha)
    cost = pl.CostEstimate(
        flops=N * HW * (4 * p + 2),
        transcendentals=0 if alpha_is_int else N * HW,
        bytes_accessed=(N * HW + N * channels * HW) * itemsize,
    )

    out_flat = pl.pallas_call(
        kernel,
        out_shape=jax.ShapeDtypeStruct((N, channels, 1, HW), x.dtype),
        grid=(N,),
        in_specs=[pl.BlockSpec((1, 1, HW), lambda n: (n, 0, 0))],
        out_specs=pl.BlockSpec((1, channels, 1, HW), lambda n: (n, 0, 0, 0)),
        compiler_params=pltpu.CompilerParams(
            dimension_semantics=("parallel",),
            # Demo blocks are tiny; 32 MiB is within every generation's physical
            # VMEM (v5e/v6e: 128 MiB, v7x: 64 MiB).  Re-derive for large frames.
            vmem_limit_bytes=32 * 1024 * 1024),
        cost_estimate=cost,
    )(x_flat)

    # Free reshape (splits the trailing flat axis back to H, W).
    return out_flat.reshape(N, channels, H, W)


def _reference(x, channels, kernel_size, alpha):
    """Pure-JAX reference: faithful translation of the PyTorch forward."""
    ks = kernel_size
    gx = jnp.linspace(ks // 2, ks // 2, ks, dtype=jnp.float32)
    gy = jnp.linspace(ks // 2, ks // 2, ks, dtype=jnp.float32)
    xx, yy = jnp.meshgrid(gx, gy, indexing="ij")   # torch.meshgrid default 'ij'
    g = 1.0 / (2.0 * math.pi) * jnp.exp(-(xx ** 2 / 2.0 + yy ** 2 / 2.0))
    filt = jnp.broadcast_to(g[None, None], (channels, 1, ks, ks)).astype(x.dtype)
    p = ks // 2
    y = jax.lax.conv_general_dilated(
        x, filt, window_strides=(1, 1), padding=[(p, p), (p, p)],
        dimension_numbers=("NCHW", "OIHW", "NCHW"))
    return y ** alpha


if __name__ == "__main__":
    key = jax.random.PRNGKey(0)
    N, H, W = 2, 16, 16
    x = jax.random.normal(key, (N, 1, H, W), dtype=jnp.float32)

    # channels=4, kernel_size=3, alpha=1
    out = jax.block_until_ready(gaussian_smoothing(x, channels=4, kernel_size=3, alpha=1))
    ref = _reference(x, 4, 3, 1)
    assert out.shape == (N, 4, H, W)
    assert jnp.allclose(out, ref, atol=1e-5, rtol=1e-5), "mismatch (C=4, ks=3, alpha=1)"

    # Exercise a larger odd kernel and the ** alpha path.
    out2 = jax.block_until_ready(gaussian_smoothing(x, channels=2, kernel_size=5, alpha=2))
    ref2 = _reference(x, 2, 5, 2)
    assert jnp.allclose(out2, ref2, atol=1e-5, rtol=1e-5), "mismatch (C=2, ks=5, alpha=2)"

    print("KERNEL_OK")
</pallas_src>

<mosaic_0001>
module attributes {stable_mosaic.version = 11 : i64} {
  func.func @_smooth_kernel(%arg0: i32, %arg1: memref<1x1x256xf32, #tpu.memory_space<vmem>>, %arg2: memref<1x4x1x256xf32, #tpu.memory_space<vmem>>) attributes {dimension_semantics = [#tpu.dimension_semantics<parallel>], iteration_bounds = array<i64: 2>, scalar_prefetch = 0 : i64, scratch_operands = 0 : i64, tpu.core_type = #tpu.core_type<tc>, window_params = [{transform_indices = @transform_0, window_bounds = array<i64: 1, 1, 256>}, {transform_indices = @transform_1, window_bounds = array<i64: 1, 4, 1, 256>}]} {
    %c0 = arith.constant 0 : index
    %c0_0 = arith.constant 0 : index
    %c0_1 = arith.constant 0 : index
    %0 = vector.load %arg1[%c0, %c0_0, %c0_1] : memref<1x1x256xf32, #tpu.memory_space<vmem>>, vector<1x1x256xf32>
    %1 = vector.shape_cast %0 : vector<1x1x256xf32> to vector<1x256xf32>
    %cst = arith.constant 0.000000e+00 : f32
    %2 = vector.broadcast %cst : f32 to vector<1x16xf32>
    %3 = vector.extract_strided_slice %1 {offsets = [0, 16], sizes = [1, 240], strides = [1, 1]} : vector<1x256xf32> to vector<1x240xf32>
    %4 = tpu.concatenate %3, %2 in 1 : vector<1x240xf32>, vector<1x16xf32> -> vector<1x256xf32>
    %5 = arith.addf %1, %4 : vector<1x256xf32>
    %6 = vector.extract_strided_slice %1 {offsets = [0, 0], sizes = [1, 240], strides = [1, 1]} : vector<1x256xf32> to vector<1x240xf32>
    %7 = tpu.concatenate %2, %6 in 1 : vector<1x16xf32>, vector<1x240xf32> -> vector<1x256xf32>
    %8 = arith.addf %5, %7 : vector<1x256xf32>
    %9 = tpu.iota {dimensions = array<i32: 1>} : vector<1x256xi32>
    %c16_i32 = arith.constant 16 : i32
    %c0_i32 = arith.constant 0 : i32
    %10 = arith.cmpi eq, %c16_i32, %c0_i32 : i32
    %c1_i32 = arith.constant 1 : i32
    %11 = arith.select %10, %c1_i32, %c16_i32 : i32
    %12 = vector.broadcast %11 : i32 to vector<1x256xi32>
    %13 = arith.remsi %9, %12 : vector<1x256xi32>
    %c0_i32_2 = arith.constant 0 : i32
    %14 = vector.broadcast %c0_i32_2 : i32 to vector<1x256xi32>
    %15 = arith.cmpi ne, %13, %14 : vector<1x256xi32>
    %c0_i32_3 = arith.constant 0 : i32
    %16 = vector.broadcast %c0_i32_3 : i32 to vector<1x256xi32>
    %17 = arith.cmpi slt, %13, %16 : vector<1x256xi32>
    %c0_i32_4 = arith.constant 0 : i32
    %18 = arith.cmpi slt, %11, %c0_i32_4 : i32
    %19 = vector.broadcast %18 : i1 to vector<1x256xi1>
    %20 = vector.broadcast %19 : vector<1x256xi1> to vector<1x256xi1>
    %21 = arith.xori %17, %20 : vector<1x256xi1>
    %22 = arith.andi %21, %15 : vector<1x256xi1>
    %23 = vector.broadcast %11 : i32 to vector<1x256xi32>
    %24 = arith.addi %13, %23 : vector<1x256xi32>
    %25 = arith.select %22, %24, %13 : vector<1x256xi1>, vector<1x256xi32>
    %cst_5 = arith.constant 0.000000e+00 : f32
    %26 = vector.broadcast %cst_5 : f32 to vector<1x1xf32>
    %27 = vector.extract_strided_slice %8 {offsets = [0, 1], sizes = [1, 255], strides = [1, 1]} : vector<1x256xf32> to vector<1x255xf32>
    %28 = tpu.concatenate %27, %26 in 1 : vector<1x255xf32>, vector<1x1xf32> -> vector<1x256xf32>
    %c15_i32 = arith.constant 15 : i32
    %29 = vector.broadcast %c15_i32 : i32 to vector<1x256xi32>
    %30 = arith.cmpi slt, %25, %29 : vector<1x256xi32>
    %cst_6 = arith.constant 0.000000e+00 : f32
    %31 = vector.broadcast %cst_6 : f32 to vector<1x256xf32>
    %32 = arith.select %30, %28, %31 : vector<1x256xi1>, vector<1x256xf32>
    %33 = arith.addf %8, %32 : vector<1x256xf32>
    %34 = vector.extract_strided_slice %8 {offsets = [0, 0], sizes = [1, 255], strides = [1, 1]} : vector<1x256xf32> to vector<1x255xf32>
    %35 = tpu.concatenate %26, %34 in 1 : vector<1x1xf32>, vector<1x255xf32> -> vector<1x256xf32>
    %c1_i32_7 = arith.constant 1 : i32
    %36 = vector.broadcast %c1_i32_7 : i32 to vector<1x256xi32>
    %37 = arith.cmpi sge, %25, %36 : vector<1x256xi32>
    %cst_8 = arith.constant 0.000000e+00 : f32
    %38 = vector.broadcast %cst_8 : f32 to vector<1x256xf32>
    %39 = arith.select %37, %35, %38 : vector<1x256xi1>, vector<1x256xf32>
    %40 = arith.addf %33, %39 : vector<1x256xf32>
    %cst_9 = arith.constant 0.0585498326 : f32
    %41 = vector.broadcast %cst_9 : f32 to vector<1x256xf32>
    %42 = arith.mulf %40, %41 : vector<1x256xf32>
    %c0_10 = arith.constant 0 : index
    %c0_11 = arith.constant 0 : index
    %c0_12 = arith.constant 0 : index
    %c0_13 = arith.constant 0 : index
    %43 = vector.load %arg2[%c0_10, %c0_11, %c0_12, %c0_13] : memref<1x4x1x256xf32, #tpu.memory_space<vmem>>, vector<1x1x1x256xf32>
    %44 = vector.shape_cast %43 : vector<1x1x1x256xf32> to vector<1x256xf32>
    %45 = vector.shape_cast %42 : vector<1x256xf32> to vector<1x1x1x256xf32>
    tpu.vector_store %arg2[%c0_10, %c0_11, %c0_12, %c0_13], %45 {strides = array<i32>} : memref<1x4x1x256xf32, #tpu.memory_space<vmem>>, vector<1x1x1x256xf32>,
    %c0_14 = arith.constant 0 : index
    %c1 = arith.constant 1 : index
    %c0_15 = arith.constant 0 : index
    %c0_16 = arith.constant 0 : index
    %46 = vector.load %arg2[%c0_14, %c1, %c0_15, %c0_16] : memref<1x4x1x256xf32, #tpu.memory_space<vmem>>, vector<1x1x1x256xf32>
    %47 = vector.shape_cast %46 : vector<1x1x1x256xf32> to vector<1x256xf32>
    %48 = vector.shape_cast %42 : vector<1x256xf32> to vector<1x1x1x256xf32>
    tpu.vector_store %arg2[%c0_14, %c1, %c0_15, %c0_16], %48 {strides = array<i32>} : memref<1x4x1x256xf32, #tpu.memory_space<vmem>>, vector<1x1x1x256xf32>,
    %c0_17 = arith.constant 0 : index
    %c2 = arith.constant 2 : index
    %c0_18 = arith.constant 0 : index
    %c0_19 = arith.constant 0 : index
    %49 = vector.load %arg2[%c0_17, %c2, %c0_18, %c0_19] : memref<1x4x1x256xf32, #tpu.memory_space<vmem>>, vector<1x1x1x256xf32>
    %50 = vector.shape_cast %49 : vector<1x1x1x256xf32> to vector<1x256xf32>
    %51 = vector.shape_cast %42 : vector<1x256xf32> to vector<1x1x1x256xf32>
    tpu.vector_store %arg2[%c0_17, %c2, %c0_18, %c0_19], %51 {strides = array<i32>} : memref<1x4x1x256xf32, #tpu.memory_space<vmem>>, vector<1x1x1x256xf32>,
    %c0_20 = arith.constant 0 : index
    %c3 = arith.constant 3 : index
    %c0_21 = arith.constant 0 : index
    %c0_22 = arith.constant 0 : index
    %52 = vector.load %arg2[%c0_20, %c3, %c0_21, %c0_22] : memref<1x4x1x256xf32, #tpu.memory_space<vmem>>, vector<1x1x1x256xf32>
    %53 = vector.shape_cast %52 : vector<1x1x1x256xf32> to vector<1x256xf32>
    %54 = vector.shape_cast %42 : vector<1x256xf32> to vector<1x1x1x256xf32>
    tpu.vector_store %arg2[%c0_20, %c3, %c0_21, %c0_22], %54 {strides = array<i32>} : memref<1x4x1x256xf32, #tpu.memory_space<vmem>>, vector<1x1x1x256xf32>,
    return
  }
  func.func @transform_0(%arg0: i32) -> (i32, i32, i32) {
    %c0_i32 = arith.constant 0 : i32
    %c0_i32_0 = arith.constant 0 : i32
    %c0_i32_1 = arith.constant 0 : i32
    return %arg0, %c0_i32, %c0_i32_0 : i32, i32, i32
  }
  func.func @transform_1(%arg0: i32) -> (i32, i32, i32, i32) {
    %c0_i32 = arith.constant 0 : i32
    %c0_i32_0 = arith.constant 0 : i32
    %c0_i32_1 = arith.constant 0 : i32
    %c0_i32_2 = arith.constant 0 : i32
    return %arg0, %c0_i32, %c0_i32_0, %c0_i32_1 : i32, i32, i32, i32
  }
}

</mosaic_0001>

<llo_original>
// kernel: tpu_custom_call.1
$region0: #{tpu_custom_call.1}
  #allocation0 [shape = 'u32[]', space=smem, size = 0x4, offset = 0x4, fixed_abs, tag = 'smem constant byte address 0x4 - core index']
  #allocation1 [shape = 'u32[144,128]{1,0:T(1,128)}', space=vmem, size = 0x12000, scoped, tag = 'internal scratch']
  %s0 = inlined_call_operand.hbm [shape: f32[2,1,256], index: 0, kind: input, shape index: {}]
  %s1 = inlined_call_operand.hbm [shape: f32[2,4,1,256], index: 1, kind: output, shape index: {}]
  %s2 = sld [smem:[#allocation0]]
  $region41: #{tpu_custom_call.1} parent=0
    _
  %s4 = ssub.s32 1, %s2
  %s5 = scalar_select 0, %s4, %s2
  $region1: #{tpu_custom_call.1} parent=0
    #allocation2 [shape = 'u8[2048]{0}', space=vmem, size = 0x800, scoped, tag = 'input window, operand 0']
    #allocation3 [shape = 's32[2]{0}', space=sflag, size = 0x8, scoped, tag = 'scoped memory for tpu_custom_call.1']
    #allocation4 [shape = 's32[2]{0}', space=sflag, size = 0x8, scoped, tag = 'scoped memory for tpu_custom_call.1']
    #allocation5 [shape = 'u8[8192]{0}', space=vmem, size = 0x2000, scoped, tag = 'output window, operand 0']
    %6 = vsyncpa [#allocation3], 0
    %s7 = scalar_lea.sflag [#allocation3], 1
    %8 = vsyncpa %s7, 0
    %9 = vsyncpa [#allocation4], 0
    %s10 = scalar_lea.sflag [#allocation4], 1
    %11 = vsyncpa %s10, 0
    loop: start=0, step=1, limit=4
    $region2: #{tpu_custom_call.1} parent=1 // loop_pre_header
      _
    $region3: #{tpu_custom_call.1} parent=1 // loop_header
      %s13 = sphi 0, %s17
      %p14 = scmp.ge.s32.totalorder %s13, 4
      %s23 = sphi 0, %s25
      %s26 = sphi 0, %s23
      %s27 = sphi 0, %s26
      %s43 = sphi 0, %s27
      %s49 = sphi 0, %s51
      %s52 = sphi 0, %s49
      %s53 = sphi 0, %s52
      %s69 = sphi 0, %s53
    $region4: #{tpu_custom_call.1} parent=1 // loop_header_branch
      %16 = sbr.rel (%p14) target = $region8
    $region5: #{tpu_custom_call.1} parent=1 // loop_body
      %s18 = ssub.s32 %s13, 1
      %s19 = ssub.s32 %s13, 2
      %s20 = sadd.s32 %s13, 1
      %s21 = ssub.s32 %s13, %s20
      %p22 = scmp.eq.s32.totalorder %s21, 0
      %s24 = sadd.s32 %s23, 1
      %s25 = scalar_select %p22, %s23, %s24
      %p28 = pneg %p22
      %p29 = scmp.eq.s32.totalorder %s13, 1
      %p30 = por %p28, %p29
      %p31 = scmp.ne.s32.totalorder %s23, %s26
      %p32 = scmp.eq.s32.totalorder %s13, 0
      %p33 = por %p31, %p32
      %p34 = scmp.ne.s32.totalorder %s23, %s26
      %p35 = scmp.eq.s32.totalorder %s18, 1
      %p36 = por %p34, %p35
      %p37 = scmp.ne.s32.totalorder %s26, %s27
      %p38 = scmp.eq.s32.totalorder %s18, 0
      %p39 = por %p37, %p38
      %p40 = scmp.ne.s32.totalorder %s26, %s27
      %p41 = scmp.eq.s32.totalorder %s19, 1
      %p42 = por %p40, %p41
      %p44 = scmp.ne.s32.totalorder %s27, %s43
      %p45 = scmp.eq.s32.totalorder %s19, 0
      %p46 = por %p44, %p45
      %s47 = ssub.s32 %s13, %s20
      %p48 = scmp.eq.s32.totalorder %s47, 0
      %s50 = sadd.s32 %s49, 1
      %s51 = scalar_select %p48, %s49, %s50
      %p54 = pneg %p48
      %p55 = scmp.eq.s32.totalorder %s13, 1
      %p56 = por %p54, %p55
      %p57 = scmp.ne.s32.totalorder %s49, %s52
      %p58 = scmp.eq.s32.totalorder %s13, 0
      %p59 = por %p57, %p58
      %p60 = scmp.ne.s32.totalorder %s49, %s52
      %p61 = scmp.eq.s32.totalorder %s18, 1
      %p62 = por %p60, %p61
      %p63 = scmp.ne.s32.totalorder %s52, %s53
      %p64 = scmp.eq.s32.totalorder %s18, 0
      %p65 = por %p63, %p64
      %p66 = scmp.ne.s32.totalorder %s52, %s53
      %p67 = scmp.eq.s32.totalorder %s19, 1
      %p68 = por %p66, %p67
      %p70 = scmp.ne.s32.totalorder %s53, %s69
      %p71 = scmp.eq.s32.totalorder %s19, 0
      %p72 = por %p70, %p71
      %p73 = scmp.le.s32.totalorder 1, %s13
      %p74 = scmp.lt.s32.totalorder %s13, 3
      %p75 = pnand %p73, %p74
      %p76 = pneg %p75
      // Predicated region
      $region9: #{tpu_custom_call.1} parent=5 // pred_check
        _
      $region10: #{tpu_custom_call.1} parent=5 // pred_check_branch
        %78 = sbr.rel (%p75) target = $region12
      $region11: #{tpu_custom_call.1} parent=5 // pred_region
        %s79 = ssub.s32 %s13, 1
      $region12: #{tpu_custom_call.1} parent=5 // pred_fallthru
        _
      %p80 = scmp.lt.s32.totalorder %s13, 2
      // Predicated region
      $region13: #{tpu_custom_call.1} parent=5 // pred_check
        %p81 = pneg %p80
      $region14: #{tpu_custom_call.1} parent=5 // pred_check_branch
        %83 = sbr.rel (%p81) target = $region16
      $region15: #{tpu_custom_call.1} parent=5 // pred_region
        // Predicated region
        $region17: #{tpu_custom_call.1} parent=15 // pred_check
          %p84 = pneg %p33
        $region18: #{tpu_custom_call.1} parent=15 // pred_check_branch
          %86 = sbr.rel (%p84) target = $region20
        $region19: #{tpu_custom_call.1} parent=15 // pred_region
          %s87 = sand.u32 %s23, 1
          %s88 = scalar_lea.sflag [#allocation3], %s87
          %s89 = sand.u32 %s23, 1
          %s90 = smul.addr %s89, 2
          %s91 = scalar_lea.vmem [#allocation2], %s90
          %s93 = ssub.s32 32, 32
          %94 = vsyncadd %s88, %s93
          %s95 = smul.addr %s13, 2
          %s96 = smul.addr %s95, 16
          %s97 = scalar_lea.hbm %s0, %s96
          %s99 = sshll.u32 %s91, 4
          %s100 = int_to_ptr.vmem [resolvable:$true] %s99
          %102 = dma.hbm_to_vmem [thread:$0]  %s97, 32, %s100, %s88
        $region20: #{tpu_custom_call.1} parent=15 // pred_fallthru
          _
      $region16: #{tpu_custom_call.1} parent=5 // pred_fallthru
        _
      %p103 = scmp.le.s32.totalorder 1, %s13
      %p104 = scmp.lt.s32.totalorder %s13, 3
      %p105 = pnand %p103, %p104
      %p106 = pneg %p105
      // Predicated region
      $region21: #{tpu_custom_call.1} parent=5 // pred_check
        _
      $region22: #{tpu_custom_call.1} parent=5 // pred_check_branch
        %108 = sbr.rel (%p105) target = $region24
      $region23: #{tpu_custom_call.1} parent=5 // pred_region
        %s109 = ssub.s32 %s13, 1
        %s110 = sand.u32 %s26, 1
        %s111 = scalar_lea.sflag [#allocation3], %s110
        %s112 = sand.u32 %s26, 1
        %s113 = smul.addr %s112, 2
        %s114 = scalar_lea.vmem [#allocation2], %s113
        // Predicated region
        $region25: #{tpu_custom_call.1} parent=23 // pred_check
          %p115 = pneg %p39
        $region26: #{tpu_custom_call.1} parent=23 // pred_check_branch
          %117 = sbr.rel (%p115) target = $region28
        $region27: #{tpu_custom_call.1} parent=23 // pred_region
          %118 = dma.done %s111, 32
        $region28: #{tpu_custom_call.1} parent=23 // pred_fallthru
          _
        %s119 = sand.u32 %s26, 1
        %s120 = scalar_lea.sflag [#allocation3], %s119
        %s121 = sand.u32 %s26, 1
        %s122 = smul.addr %s121, 2
        %s123 = scalar_lea.vmem [#allocation2], %s122
        %p124 = pneg %p39
        %p125 = pneg %p36
        %p126 = pneg %p65
        %p127 = pneg %p62
        %s128 = sand.u32 %s52, 1
        %s129 = scalar_lea.sflag [#allocation4], %s128
        %s130 = sand.u32 %s52, 1
        %s131 = smul.addr %s130, 8
        %s132 = scalar_lea.vmem [#allocation5], %s131
        %v133 = vld [vmem:[%s114] sm:$0x3]
        %v135 = vlaneseq
        %v136 = vshrl.u32 %v135, 7
        %v137 = vsub.s32 0, %v136
        %v138 = vrot.slane %v133, %v137
        %v139 = vlaneseq
        %v140 = vshrl.u32 %v139, 7
        %v141 = vsub.s32 1, %v140
        %v142 = vrot.slane %v133, %v141
        %143 = vrot.lane.b32.xlu0 %v138, 112
        %v144 = vpop.permute.xlu0 %143
        %145 = vrot.lane.b32.xlu0 %v142, 112
        %v146 = vpop.permute.xlu0 %145
        %vm147 = vcmask 916480
        %v148 = vsel %vm147, %v144, %v146
        %v150 = vsel %vm147, %v146, 0.0
        %v152 = vcombine.low %v148, %v150
        %v154 = vunpack.c.l.s4 1966171168
        %v155 = vunpack.c.0.s8 %v154
        %v156 = vlaneseq
        %v157 = vshrl.u32 %v156, 7
        %v158 = vsub.s32 %v155, %v157
        %v159 = vrot.slane %v152, %v158
        %v161 = vunpack.c.l.s4 1966171168
        %v162 = vunpack.c.0.s8 %v161
        %v163 = vlaneseq
        %v164 = vshrl.u32 %v163, 7
        %v165 = vsub.s32 %v162, %v164
        %v166 = vrot.slane %v159, %v165
        %v168 = vadd.f32 %v133, %v166
        %169 = vrot.lane.b32.xlu0 %v138, 16
        %v170 = vpop.permute.xlu0 %169
        %171 = vrot.lane.b32.xlu0 %v142, 16
        %v172 = vpop.permute.xlu0 %171
        %vm173 = vcmask 130048
        %v174 = vsel %vm173, %v170, %v172
        %v176 = vsel %vm173, 0.0, %v170
        %v178 = vcombine.low %v176, %v174
        %v180 = vunpack.c.l.s4 1966171168
        %v181 = vunpack.c.0.s8 %v180
        %v182 = vlaneseq
        %v183 = vshrl.u32 %v182, 7
        %v184 = vsub.s32 %v181, %v183
        %v185 = vrot.slane %v178, %v184
        %v187 = vunpack.c.l.s4 1966171168
        %v188 = vunpack.c.0.s8 %v187
        %v189 = vlaneseq
        %v190 = vshrl.u32 %v189, 7
        %v191 = vsub.s32 %v188, %v190
        %v192 = vrot.slane %v185, %v191
        %v194 = vadd.f32 %v168, %v192
        %v195 = vlaneseq
        %v196 = vand.u32 %v195, 127
        %v197 = vadd.s32 %v196, 128
        %vm198 = vcmp.lt.s32.totalorder %v196, 0
        %v199 = vsub.s32 0, %v196
        %v200 = vsel %vm198, %v199, %v196
        %v201 = vshrl.u32 %v200, 4
        %v202 = vand.u32 %v200, 15
        %v203 = vsub.s32 0, %v202
        %v204 = vsel %vm198, %v203, %v202
        %vm205 = vcmp.lt.s32.totalorder %v197, 0
        %v206 = vsub.s32 0, %v197
        %v207 = vsel %vm205, %v206, %v197
        %v208 = vshrl.u32 %v207, 4
        %v209 = vand.u32 %v207, 15
        %v210 = vsub.s32 0, %v209
        %v211 = vsel %vm205, %v210, %v209
        %vm212 = vcmp.ne.s32.totalorder %v204, 0
        %vm213 = vcmp.ne.s32.totalorder %v211, 0
        %vm214 = vcmp.lt.s32.totalorder %v204, 0
        %vm215 = vcmp.lt.s32.totalorder %v211, 0
        %vm216 = vmand %vm214, %vm212
        %vm217 = vmand %vm215, %vm213
        %v218 = vadd.s32 %v204, 16
        %v219 = vadd.s32 %v211, 16
        %v220 = vsel %vm216, %v218, %v204
        %v221 = vsel %vm217, %v219, %v211
        %v223 = vlaneseq
        %v224 = vshrl.u32 %v223, 7
        %v225 = vsub.s32 0, %v224
        %v226 = vrot.slane %v194, %v225
        %v227 = vlaneseq
        %v228 = vshrl.u32 %v227, 7
        %v229 = vsub.s32 1, %v228
        %v230 = vrot.slane %v194, %v229
        %231 = vrot.lane.b32.xlu0 %v226, 127
        %v232 = vpop.permute.xlu0 %231
        %233 = vrot.lane.b32.xlu0 %v230, 127
        %v234 = vpop.permute.xlu0 %233
        %vm235 = vcmask 1039360
        %v236 = vsel %vm235, %v232, %v234
        %v239 = vsel %vm235, %v234, 0.0
        %vm240 = vcmp.lt.s32.totalorder %v220, 15
        %vm241 = vcmp.lt.s32.totalorder %v221, 15
        %v242 = vsel %vm240, %v236, 0.0
        %v243 = vsel %vm241, %v239, 0.0
        %v246 = vcombine.low %v242, %v243
        %v248 = vunpack.c.l.s4 1966171168
        %v249 = vunpack.c.0.s8 %v248
        %v250 = vlaneseq
        %v251 = vshrl.u32 %v250, 7
        %v252 = vsub.s32 %v249, %v251
        %v253 = vrot.slane %v246, %v252
        %v255 = vunpack.c.l.s4 1966171168
        %v256 = vunpack.c.0.s8 %v255
        %v257 = vlaneseq
        %v258 = vshrl.u32 %v257, 7
        %v259 = vsub.s32 %v256, %v258
        %v260 = vrot.slane %v253, %v259
        %v262 = vadd.f32 %v194, %v260
        %263 = vrot.lane.b32.xlu0 %v226, 1
        %v264 = vpop.permute.xlu0 %263
        %265 = vrot.lane.b32.xlu0 %v230, 1
        %v266 = vpop.permute.xlu0 %265
        %vm267 = vcmask 7168
        %v268 = vsel %vm267, %v264, %v266
        %v271 = vsel %vm267, 0.0, %v264
        %vm272 = vcmp.ge.s32.totalorder %v220, 1
        %vm273 = vcmp.ge.s32.totalorder %v221, 1
        %v274 = vsel %vm272, %v271, 0.0
        %v275 = vsel %vm273, %v268, 0.0
        %v278 = vcombine.low %v274, %v275
        %v280 = vunpack.c.l.s4 1966171168
        %v281 = vunpack.c.0.s8 %v280
        %v282 = vlaneseq
        %v283 = vshrl.u32 %v282, 7
        %v284 = vsub.s32 %v281, %v283
        %v285 = vrot.slane %v278, %v284
        %v287 = vunpack.c.l.s4 1966171168
        %v288 = vunpack.c.0.s8 %v287
        %v289 = vlaneseq
        %v290 = vshrl.u32 %v289, 7
        %v291 = vsub.s32 %v288, %v290
        %v292 = vrot.slane %v285, %v291
        %v294 = vadd.f32 %v262, %v292
        %v295 = vmul.f32 %v294, 0.058549833
        %v296 = vlaneseq
        %vm297 = vcmp.ge.s32.totalorder %v296, 0
        %vm298 = vcmp.lt.s32.totalorder %v296, 256
        %vm299 = vmand %vm297, %vm298
        %300 = vst.msk [vmem:[%s132] sm:$0x3] %vm299, %v295
        %s301 = scalar_lea.vmem %s132, 2 [#allocation5]
        %302 = vst.msk [vmem:[%s301] sm:$0x3] %vm299, %v295
        %s303 = scalar_lea.vmem %s132, 4 [#allocation5]
        %304 = vst.msk [vmem:[%s303] sm:$0x3] %vm299, %v295
        %s305 = scalar_lea.vmem %s132, 6 [#allocation5]
        %306 = vst.msk [vmem:[%s305] sm:$0x3] %vm299, %v295
        %s307 = sand.u32 %s52, 1
        %s308 = scalar_lea.sflag [#allocation4], %s307
        %s309 = sand.u32 %s52, 1
        %s310 = smul.addr %s309, 8
        %s311 = scalar_lea.vmem [#allocation5], %s310
        // Predicated region
        $region29: #{tpu_custom_call.1} parent=23 // pred_check
          %p312 = pneg %p62
        $region30: #{tpu_custom_call.1} parent=23 // pred_check_branch
          %314 = sbr.rel (%p312) target = $region32
        $region31: #{tpu_custom_call.1} parent=23 // pred_region
          %s316 = ssub.s32 128, 128
          %317 = vsyncadd %s308, %s316
          %s318 = smul.addr %s18, 8
          %s319 = smul.addr %s318, 16
          %s320 = scalar_lea.hbm %s1, %s319
          %s321 = sshll.u32 %s311, 4
          %s322 = int_to_ptr.vmem [resolvable:$true] %s321
          %327 = dma.vmem_to_hbm [thread:$0]  %s322, 128, %s320, %s308, 32, 32, 2
        $region32: #{tpu_custom_call.1} parent=23 // pred_fallthru
          _
      $region24: #{tpu_custom_call.1} parent=5 // pred_fallthru
        _
      %p328 = scmp.le.s32.totalorder 2, %s13
      // Predicated region
      $region33: #{tpu_custom_call.1} parent=5 // pred_check
        %p329 = pneg %p328
      $region34: #{tpu_custom_call.1} parent=5 // pred_check_branch
        %331 = sbr.rel (%p329) target = $region36
      $region35: #{tpu_custom_call.1} parent=5 // pred_region
        %s332 = ssub.s32 %s13, 2
        // Predicated region
        $region37: #{tpu_custom_call.1} parent=35 // pred_check
          %p333 = pneg %p68
        $region38: #{tpu_custom_call.1} parent=35 // pred_check_branch
          %335 = sbr.rel (%p333) target = $region40
        $region39: #{tpu_custom_call.1} parent=35 // pred_region
          %s336 = sand.u32 %s53, 1
          %s337 = scalar_lea.sflag [#allocation4], %s336
          %s338 = sand.u32 %s53, 1
          %s339 = smul.addr %s338, 8
          %s340 = scalar_lea.vmem [#allocation5], %s339
          %341 = dma.done %s337, 128
        $region40: #{tpu_custom_call.1} parent=35 // pred_fallthru
          _
      $region36: #{tpu_custom_call.1} parent=5 // pred_fallthru
        _
    $region6: #{tpu_custom_call.1} parent=1 // loop_footer
      %s17 = sadd.s32 1, %s13
    $region7: #{tpu_custom_call.1} parent=1 // loop_footer_branch
      %12 = sbr.rel target = $region3
    $region8: #{tpu_custom_call.1} parent=1 // loop_exit
      _
    %342 = vsyncpa [#allocation3], 1
    %s343 = scalar_lea.sflag [#allocation3], 1
    %344 = vsyncpa %s343, 1
    %345 = vsyncpa [#allocation4], 1
    %s346 = scalar_lea.sflag [#allocation4], 1
    %347 = vsyncpa %s346, 1

</llo_original>
